<compile_context>
chip_gen: v7x
topology: tpu7x:2x2x1
jax: 0.10.0
libtpu: 0.0.40
codegen_flags: <defaults>
</compile_context>

<pallas_src>
import math
import jax
import jax.numpy as jnp
from jax import lax
from jax.experimental import pallas as pl
from jax.experimental.pallas import tpu as pltpu


IN_DIM = 2
HID = 50
OUT_DIM = 4
TB_MAX = 512  # max batch tile (multiple of 8); sweepable 512-2048


def _round_up(x, m):
    return ((x + m - 1) // m) * m


def _generator_kernel(a0_ref, a1_ref,
                      w1_ref, b1_ref,
                      w2_ref, b2_ref,
                      w3_ref, b3_ref,
                      w4_ref, b4_ref,
                      w5_ref, b5_ref,
                      o_ref, h_scratch):
    # First layer: K=2 contraction done as VPU broadcast-FMAs (no MXU pass).
    w1 = w1_ref[...]                                    # (2, HID)
    h_scratch[...] = jnp.tanh(a0_ref[...] * w1[0:1, :]  # (TB,1)*(1,HID)
                              + a1_ref[...] * w1[1:2, :]
                              + b1_ref[...])

    # Hidden layers: 50x50 MXU matmuls with f32 accumulation, staged in VMEM.
    h_scratch[...] = jnp.tanh(
        jnp.dot(h_scratch[...], w2_ref[...], preferred_element_type=jnp.float32)
        + b2_ref[...])
    h_scratch[...] = jnp.tanh(
        jnp.dot(h_scratch[...], w3_ref[...], preferred_element_type=jnp.float32)
        + b3_ref[...])
    h_scratch[...] = jnp.tanh(
        jnp.dot(h_scratch[...], w4_ref[...], preferred_element_type=jnp.float32)
        + b4_ref[...])

    z = jnp.dot(h_scratch[...], w5_ref[...],
                preferred_element_type=jnp.float32) + b5_ref[...]

    # res[:, 0] = exp(res[:, 0]); res[:, 1] = exp(res[:, 1])
    col = lax.broadcasted_iota(jnp.int32, z.shape, dimension=1)
    o_ref[...] = jnp.where(col < 2, jnp.exp(z), z)


def generator_forward(a, params):
    """a: tuple of float arrays whose feature dims sum to 2 (typically two (N,1))."""
    # Fast path: the canonical PINN input, two (N, 1) coordinate columns
    # -> no host-side concatenate at all.
    if len(a) == 2 and a[0].shape[1] == 1 and a[1].shape[1] == 1:
        a0 = a[0].astype(jnp.float32)
        a1 = a[1].astype(jnp.float32)
    else:
        x = jnp.concatenate(a, axis=1).astype(jnp.float32)
        assert x.shape[1] == IN_DIM
        a0, a1 = x[:, 0:1], x[:, 1:2]

    N = a0.shape[0]
    tb = min(TB_MAX, _round_up(N, 8))
    grid = (pl.cdiv(N, tb),)

    (w1, b1), (w2, b2), (w3, b3), (w4, b4), (w5, b5) = params

    def full_spec(shape):
        return pl.BlockSpec(shape, lambda i: (0,) * len(shape))

    cost = pl.CostEstimate(
        flops=2 * N * (IN_DIM * HID + 3 * HID * HID + HID * OUT_DIM),
        transcendentals=N * (4 * HID + 2),
        bytes_accessed=N * 4 * (IN_DIM + OUT_DIM)
        + 4 * (IN_DIM * HID + 3 * HID * HID + HID * OUT_DIM + 4 * HID + OUT_DIM),
    )

    out = pl.pallas_call(
        _generator_kernel,
        out_shape=jax.ShapeDtypeStruct((N, OUT_DIM), jnp.float32),
        grid_spec=pltpu.PrefetchScalarGridSpec(
            num_scalar_prefetch=0,
            grid=grid,
            in_specs=[
                pl.BlockSpec((tb, 1), lambda i: (i, 0)),       # a0
                pl.BlockSpec((tb, 1), lambda i: (i, 0)),       # a1
                full_spec((IN_DIM, HID)), full_spec((1, HID)),
                full_spec((HID, HID)), full_spec((1, HID)),
                full_spec((HID, HID)), full_spec((1, HID)),
                full_spec((HID, HID)), full_spec((1, HID)),
                full_spec((HID, OUT_DIM)), full_spec((1, OUT_DIM)),
            ],
            out_specs=pl.BlockSpec((tb, OUT_DIM), lambda i: (i, 0)),
            scratch_shapes=[pltpu.VMEM((tb, HID), jnp.float32)],
        ),
        compiler_params=pltpu.CompilerParams(
            dimension_semantics=("parallel",),
            vmem_limit_bytes=32 * 1024 * 1024),
        cost_estimate=cost,
    )(a0, a1, w1, b1, w2, b2, w3, b3, w4, b4, w5, b5)

    return out


def init_params(key):
    """Deterministic init mimicking torch.nn.Linear (uniform +/- 1/sqrt(fan_in)).
    Weights stored transposed for x @ W (shape [in, out]); biases as (1, out)."""
    dims = [(IN_DIM, HID), (HID, HID), (HID, HID), (HID, HID), (HID, OUT_DIM)]
    params = []
    for (fan_in, fan_out) in dims:
        key, kw, kb = jax.random.split(key, 3)
        bound = 1.0 / math.sqrt(fan_in)
        w = jax.random.uniform(kw, (fan_in, fan_out), jnp.float32, -bound, bound)
        b = jax.random.uniform(kb, (1, fan_out), jnp.float32, -bound, bound)
        params.append((w, b))
    return params


def generator_ref(a, params):
    """Pure-JAX reference for correctness checking."""
    x = jnp.concatenate(a, axis=1).astype(jnp.float32)
    h = x
    for i, (w, b) in enumerate(params):
        h = h @ w + b
        if i < len(params) - 1:
            h = jnp.tanh(h)
    col = lax.broadcasted_iota(jnp.int32, h.shape, dimension=1)
    return jnp.where(col < 2, jnp.exp(h), h)


if __name__ == "__main__":
    key = jax.random.PRNGKey(0)
    params = init_params(key)

    kx, kt = jax.random.split(jax.random.PRNGKey(0))
    N = 8
    # the tuple `a`: e.g. (x_coords, t_coords), each (N, 1), concatenated to (N, 2)
    a = (jax.random.normal(kx, (N, 1), jnp.float32),
         jax.random.normal(kt, (N, 1), jnp.float32))

    out = generator_forward(a, params)
    out = jax.block_until_ready(out)

    ref = generator_ref(a, params)
    assert out.shape == (N, OUT_DIM)
    assert jnp.allclose(out, ref, atol=1e-5, rtol=1e-5), "mismatch vs reference"

    print("KERNEL_OK")
</pallas_src>

<mosaic_0001>
module attributes {stable_mosaic.version = 11 : i64} {
  func.func @_generator_kernel(%arg0: i32, %arg1: memref<8x1xf32, #tpu.memory_space<vmem>>, %arg2: memref<8x1xf32, #tpu.memory_space<vmem>>, %arg3: memref<2x50xf32, #tpu.memory_space<vmem>>, %arg4: memref<1x50xf32, #tpu.memory_space<vmem>>, %arg5: memref<50x50xf32, #tpu.memory_space<vmem>>, %arg6: memref<1x50xf32, #tpu.memory_space<vmem>>, %arg7: memref<50x50xf32, #tpu.memory_space<vmem>>, %arg8: memref<1x50xf32, #tpu.memory_space<vmem>>, %arg9: memref<50x50xf32, #tpu.memory_space<vmem>>, %arg10: memref<1x50xf32, #tpu.memory_space<vmem>>, %arg11: memref<50x4xf32, #tpu.memory_space<vmem>>, %arg12: memref<1x4xf32, #tpu.memory_space<vmem>>, %arg13: memref<8x4xf32, #tpu.memory_space<vmem>>, %arg14: memref<8x50xf32, #tpu.memory_space<vmem>>) attributes {dimension_semantics = [#tpu.dimension_semantics<parallel>], iteration_bounds = array<i64: 1>, scalar_prefetch = 0 : i64, scratch_operands = 1 : i64, tpu.core_type = #tpu.core_type<tc>, window_params = [{transform_indices = @transform_0, window_bounds = array<i64: 8, 1>}, {transform_indices = @transform_1, window_bounds = array<i64: 8, 1>}, {pipeline_mode = #tpu.pipeline_mode<synchronous>, transform_indices = @transform_2, window_bounds = array<i64: 2, 50>}, {pipeline_mode = #tpu.pipeline_mode<synchronous>, transform_indices = @transform_3, window_bounds = array<i64: 1, 50>}, {pipeline_mode = #tpu.pipeline_mode<synchronous>, transform_indices = @transform_4, window_bounds = array<i64: 50, 50>}, {pipeline_mode = #tpu.pipeline_mode<synchronous>, transform_indices = @transform_5, window_bounds = array<i64: 1, 50>}, {pipeline_mode = #tpu.pipeline_mode<synchronous>, transform_indices = @transform_6, window_bounds = array<i64: 50, 50>}, {pipeline_mode = #tpu.pipeline_mode<synchronous>, transform_indices = @transform_7, window_bounds = array<i64: 1, 50>}, {pipeline_mode = #tpu.pipeline_mode<synchronous>, transform_indices = @transform_8, window_bounds = array<i64: 50, 50>}, {pipeline_mode = #tpu.pipeline_mode<synchronous>, transform_indices = @transform_9, window_bounds = array<i64: 1, 50>}, {pipeline_mode = #tpu.pipeline_mode<synchronous>, transform_indices = @transform_10, window_bounds = array<i64: 50, 4>}, {pipeline_mode = #tpu.pipeline_mode<synchronous>, transform_indices = @transform_11, window_bounds = array<i64: 1, 4>}, {transform_indices = @transform_12, window_bounds = array<i64: 8, 4>}]} {
    %c0 = arith.constant 0 : index
    %c0_0 = arith.constant 0 : index
    %0 = vector.load %arg3[%c0, %c0_0] : memref<2x50xf32, #tpu.memory_space<vmem>>, vector<2x50xf32>
    %c0_1 = arith.constant 0 : index
    %c0_2 = arith.constant 0 : index
    %1 = vector.load %arg1[%c0_1, %c0_2] : memref<8x1xf32, #tpu.memory_space<vmem>>, vector<8x1xf32>
    %2 = vector.extract_strided_slice %0 {offsets = [0, 0], sizes = [1, 50], strides = [1, 1]} : vector<2x50xf32> to vector<1x50xf32>
    %3 = vector.broadcast %1 : vector<8x1xf32> to vector<8x50xf32>
    %4 = vector.broadcast %2 : vector<1x50xf32> to vector<8x50xf32>
    %5 = arith.mulf %3, %4 : vector<8x50xf32>
    %c0_3 = arith.constant 0 : index
    %c0_4 = arith.constant 0 : index
    %6 = vector.load %arg2[%c0_3, %c0_4] : memref<8x1xf32, #tpu.memory_space<vmem>>, vector<8x1xf32>
    %7 = vector.extract_strided_slice %0 {offsets = [1, 0], sizes = [1, 50], strides = [1, 1]} : vector<2x50xf32> to vector<1x50xf32>
    %8 = vector.broadcast %6 : vector<8x1xf32> to vector<8x50xf32>
    %9 = vector.broadcast %7 : vector<1x50xf32> to vector<8x50xf32>
    %10 = arith.mulf %8, %9 : vector<8x50xf32>
    %11 = arith.addf %5, %10 : vector<8x50xf32>
    %c0_5 = arith.constant 0 : index
    %c0_6 = arith.constant 0 : index
    %12 = vector.load %arg4[%c0_5, %c0_6] : memref<1x50xf32, #tpu.memory_space<vmem>>, vector<1x50xf32>
    %13 = vector.broadcast %12 : vector<1x50xf32> to vector<8x50xf32>
    %14 = arith.addf %11, %13 : vector<8x50xf32>
    %15 = math.tanh %14 : vector<8x50xf32>
    %c0_7 = arith.constant 0 : index
    %c0_8 = arith.constant 0 : index
    %16 = vector.load %arg14[%c0_7, %c0_8] : memref<8x50xf32, #tpu.memory_space<vmem>>, vector<8x50xf32>
    tpu.vector_store %arg14[%c0_7, %c0_8], %15 {strides = array<i32>} : memref<8x50xf32, #tpu.memory_space<vmem>>, vector<8x50xf32>,
    %c0_9 = arith.constant 0 : index
    %c0_10 = arith.constant 0 : index
    %17 = vector.load %arg14[%c0_9, %c0_10] : memref<8x50xf32, #tpu.memory_space<vmem>>, vector<8x50xf32>
    %c0_11 = arith.constant 0 : index
    %c0_12 = arith.constant 0 : index
    %18 = vector.load %arg5[%c0_11, %c0_12] : memref<50x50xf32, #tpu.memory_space<vmem>>, vector<50x50xf32>
    %cst = arith.constant dense<0.000000e+00> : vector<8x50xf32>
    %19 = tpu.matmul %17, %18, %cst {dimension_numbers = #tpu.dot_dimension_numbers<[1], [0], [0], [1], [0, 0, 1, 1], [], []>} : vector<8x50xf32>, vector<50x50xf32>, vector<8x50xf32> -> vector<8x50xf32>
    %c0_13 = arith.constant 0 : index
    %c0_14 = arith.constant 0 : index
    %20 = vector.load %arg6[%c0_13, %c0_14] : memref<1x50xf32, #tpu.memory_space<vmem>>, vector<1x50xf32>
    %21 = vector.broadcast %20 : vector<1x50xf32> to vector<8x50xf32>
    %22 = arith.addf %19, %21 : vector<8x50xf32>
    %23 = math.tanh %22 : vector<8x50xf32>
    %c0_15 = arith.constant 0 : index
    %c0_16 = arith.constant 0 : index
    %24 = vector.load %arg14[%c0_15, %c0_16] : memref<8x50xf32, #tpu.memory_space<vmem>>, vector<8x50xf32>
    tpu.vector_store %arg14[%c0_15, %c0_16], %23 {strides = array<i32>} : memref<8x50xf32, #tpu.memory_space<vmem>>, vector<8x50xf32>,
    %c0_17 = arith.constant 0 : index
    %c0_18 = arith.constant 0 : index
    %25 = vector.load %arg14[%c0_17, %c0_18] : memref<8x50xf32, #tpu.memory_space<vmem>>, vector<8x50xf32>
    %c0_19 = arith.constant 0 : index
    %c0_20 = arith.constant 0 : index
    %26 = vector.load %arg7[%c0_19, %c0_20] : memref<50x50xf32, #tpu.memory_space<vmem>>, vector<50x50xf32>
    %cst_21 = arith.constant dense<0.000000e+00> : vector<8x50xf32>
    %27 = tpu.matmul %25, %26, %cst_21 {dimension_numbers = #tpu.dot_dimension_numbers<[1], [0], [0], [1], [0, 0, 1, 1], [], []>} : vector<8x50xf32>, vector<50x50xf32>, vector<8x50xf32> -> vector<8x50xf32>
    %c0_22 = arith.constant 0 : index
    %c0_23 = arith.constant 0 : index
    %28 = vector.load %arg8[%c0_22, %c0_23] : memref<1x50xf32, #tpu.memory_space<vmem>>, vector<1x50xf32>
    %29 = vector.broadcast %28 : vector<1x50xf32> to vector<8x50xf32>
    %30 = arith.addf %27, %29 : vector<8x50xf32>
    %31 = math.tanh %30 : vector<8x50xf32>
    %c0_24 = arith.constant 0 : index
    %c0_25 = arith.constant 0 : index
    %32 = vector.load %arg14[%c0_24, %c0_25] : memref<8x50xf32, #tpu.memory_space<vmem>>, vector<8x50xf32>
    tpu.vector_store %arg14[%c0_24, %c0_25], %31 {strides = array<i32>} : memref<8x50xf32, #tpu.memory_space<vmem>>, vector<8x50xf32>,
    %c0_26 = arith.constant 0 : index
    %c0_27 = arith.constant 0 : index
    %33 = vector.load %arg14[%c0_26, %c0_27] : memref<8x50xf32, #tpu.memory_space<vmem>>, vector<8x50xf32>
    %c0_28 = arith.constant 0 : index
    %c0_29 = arith.constant 0 : index
    %34 = vector.load %arg9[%c0_28, %c0_29] : memref<50x50xf32, #tpu.memory_space<vmem>>, vector<50x50xf32>
    %cst_30 = arith.constant dense<0.000000e+00> : vector<8x50xf32>
    %35 = tpu.matmul %33, %34, %cst_30 {dimension_numbers = #tpu.dot_dimension_numbers<[1], [0], [0], [1], [0, 0, 1, 1], [], []>} : vector<8x50xf32>, vector<50x50xf32>, vector<8x50xf32> -> vector<8x50xf32>
    %c0_31 = arith.constant 0 : index
    %c0_32 = arith.constant 0 : index
    %36 = vector.load %arg10[%c0_31, %c0_32] : memref<1x50xf32, #tpu.memory_space<vmem>>, vector<1x50xf32>
    %37 = vector.broadcast %36 : vector<1x50xf32> to vector<8x50xf32>
    %38 = arith.addf %35, %37 : vector<8x50xf32>
    %39 = math.tanh %38 : vector<8x50xf32>
    %c0_33 = arith.constant 0 : index
    %c0_34 = arith.constant 0 : index
    %40 = vector.load %arg14[%c0_33, %c0_34] : memref<8x50xf32, #tpu.memory_space<vmem>>, vector<8x50xf32>
    tpu.vector_store %arg14[%c0_33, %c0_34], %39 {strides = array<i32>} : memref<8x50xf32, #tpu.memory_space<vmem>>, vector<8x50xf32>,
    %c0_35 = arith.constant 0 : index
    %c0_36 = arith.constant 0 : index
    %41 = vector.load %arg14[%c0_35, %c0_36] : memref<8x50xf32, #tpu.memory_space<vmem>>, vector<8x50xf32>
    %c0_37 = arith.constant 0 : index
    %c0_38 = arith.constant 0 : index
    %42 = vector.load %arg11[%c0_37, %c0_38] : memref<50x4xf32, #tpu.memory_space<vmem>>, vector<50x4xf32>
    %cst_39 = arith.constant dense<0.000000e+00> : vector<8x4xf32>
    %43 = tpu.matmul %41, %42, %cst_39 {dimension_numbers = #tpu.dot_dimension_numbers<[1], [0], [0], [1], [0, 0, 1, 1], [], []>} : vector<8x50xf32>, vector<50x4xf32>, vector<8x4xf32> -> vector<8x4xf32>
    %c0_40 = arith.constant 0 : index
    %c0_41 = arith.constant 0 : index
    %44 = vector.load %arg12[%c0_40, %c0_41] : memref<1x4xf32, #tpu.memory_space<vmem>>, vector<1x4xf32>
    %45 = vector.broadcast %44 : vector<1x4xf32> to vector<8x4xf32>
    %46 = arith.addf %43, %45 : vector<8x4xf32>
    %47 = tpu.iota {dimensions = array<i32: 1>} : vector<8x4xi32>
    %c2_i32 = arith.constant 2 : i32
    %48 = vector.broadcast %c2_i32 : i32 to vector<8x4xi32>
    %49 = arith.cmpi slt, %47, %48 : vector<8x4xi32>
    %50 = math.exp %46 : vector<8x4xf32>
    %51 = arith.select %49, %50, %46 : vector<8x4xi1>, vector<8x4xf32>
    %c0_42 = arith.constant 0 : index
    %c0_43 = arith.constant 0 : index
    %52 = vector.load %arg13[%c0_42, %c0_43] : memref<8x4xf32, #tpu.memory_space<vmem>>, vector<8x4xf32>
    tpu.vector_store %arg13[%c0_42, %c0_43], %51 {strides = array<i32>} : memref<8x4xf32, #tpu.memory_space<vmem>>, vector<8x4xf32>,
    return
  }
  func.func @transform_0(%arg0: i32) -> (i32, i32) {
    %c0_i32 = arith.constant 0 : i32
    %c0_i32_0 = arith.constant 0 : i32
    return %arg0, %c0_i32 : i32, i32
  }
  func.func @transform_1(%arg0: i32) -> (i32, i32) {
    %c0_i32 = arith.constant 0 : i32
    %c0_i32_0 = arith.constant 0 : i32
    return %arg0, %c0_i32 : i32, i32
  }
  func.func @transform_2(%arg0: i32) -> (i32, i32) {
    %c0_i32 = arith.constant 0 : i32
    %c0_i32_0 = arith.constant 0 : i32
    %c0_i32_1 = arith.constant 0 : i32
    return %c0_i32, %c0_i32_0 : i32, i32
  }
  func.func @transform_3(%arg0: i32) -> (i32, i32) {
    %c0_i32 = arith.constant 0 : i32
    %c0_i32_0 = arith.constant 0 : i32
    %c0_i32_1 = arith.constant 0 : i32
    return %c0_i32, %c0_i32_0 : i32, i32
  }
  func.func @transform_4(%arg0: i32) -> (i32, i32) {
    %c0_i32 = arith.constant 0 : i32
    %c0_i32_0 = arith.constant 0 : i32
    %c0_i32_1 = arith.constant 0 : i32
    return %c0_i32, %c0_i32_0 : i32, i32
  }
  func.func @transform_5(%arg0: i32) -> (i32, i32) {
    %c0_i32 = arith.constant 0 : i32
    %c0_i32_0 = arith.constant 0 : i32
    %c0_i32_1 = arith.constant 0 : i32
    return %c0_i32, %c0_i32_0 : i32, i32
  }
  func.func @transform_6(%arg0: i32) -> (i32, i32) {
    %c0_i32 = arith.constant 0 : i32
    %c0_i32_0 = arith.constant 0 : i32
    %c0_i32_1 = arith.constant 0 : i32
    return %c0_i32, %c0_i32_0 : i32, i32
  }
  func.func @transform_7(%arg0: i32) -> (i32, i32) {
    %c0_i32 = arith.constant 0 : i32
    %c0_i32_0 = arith.constant 0 : i32
    %c0_i32_1 = arith.constant 0 : i32
    return %c0_i32, %c0_i32_0 : i32, i32
  }
  func.func @transform_8(%arg0: i32) -> (i32, i32) {
    %c0_i32 = arith.constant 0 : i32
    %c0_i32_0 = arith.constant 0 : i32
    %c0_i32_1 = arith.constant 0 : i32
    return %c0_i32, %c0_i32_0 : i32, i32
  }
  func.func @transform_9(%arg0: i32) -> (i32, i32) {
    %c0_i32 = arith.constant 0 : i32
    %c0_i32_0 = arith.constant 0 : i32
    %c0_i32_1 = arith.constant 0 : i32
    return %c0_i32, %c0_i32_0 : i32, i32
  }
  func.func @transform_10(%arg0: i32) -> (i32, i32) {
    %c0_i32 = arith.constant 0 : i32
    %c0_i32_0 = arith.constant 0 : i32
    %c0_i32_1 = arith.constant 0 : i32
    return %c0_i32, %c0_i32_0 : i32, i32
  }
  func.func @transform_11(%arg0: i32) -> (i32, i32) {
    %c0_i32 = arith.constant 0 : i32
    %c0_i32_0 = arith.constant 0 : i32
    %c0_i32_1 = arith.constant 0 : i32
    return %c0_i32, %c0_i32_0 : i32, i32
  }
  func.func @transform_12(%arg0: i32) -> (i32, i32) {
    %c0_i32 = arith.constant 0 : i32
    %c0_i32_0 = arith.constant 0 : i32
    return %arg0, %c0_i32 : i32, i32
  }
}

</mosaic_0001>

<llo_original>
// kernel: tpu_custom_call.1
$region0: #{tpu_custom_call.1}
  #allocation0 [shape = 'u32[]', space=smem, size = 0x4, offset = 0x4, fixed_abs, tag = 'smem constant byte address 0x4 - core index']
  #allocation1 [shape = 'u32[144,128]{1,0:T(1,128)}', space=vmem, size = 0x12000, scoped, tag = 'internal scratch']
  #allocation2 [shape = 'f32[8,50]{1,0:T(8,128)}', space=vmem, size = 0x1000, scoped, tag = 'scratch operand']
  %s0 = inlined_call_operand.vmem [shape: f32[8,1], index: 0, kind: input, shape index: {}]
  %s1 = inlined_call_operand.vmem [shape: f32[8,1], index: 1, kind: input, shape index: {}]
  %s2 = inlined_call_operand.vmem [shape: f32[2,50], index: 2, kind: input, shape index: {}]
  %s3 = inlined_call_operand.vmem [shape: f32[1,50], index: 3, kind: input, shape index: {}]
  %s4 = inlined_call_operand.vmem [shape: f32[50,50], index: 4, kind: input, shape index: {}]
  %s5 = inlined_call_operand.vmem [shape: f32[1,50], index: 5, kind: input, shape index: {}]
  %s6 = inlined_call_operand.hbm [shape: f32[50,50], index: 6, kind: input, shape index: {}]
  %s7 = inlined_call_operand.vmem [shape: f32[1,50], index: 7, kind: input, shape index: {}]
  %s8 = inlined_call_operand.hbm [shape: f32[50,50], index: 8, kind: input, shape index: {}]
  %s9 = inlined_call_operand.vmem [shape: f32[1,50], index: 9, kind: input, shape index: {}]
  %s10 = inlined_call_operand.vmem [shape: f32[50,4], index: 10, kind: input, shape index: {}]
  %s11 = inlined_call_operand.vmem [shape: f32[1,4], index: 11, kind: input, shape index: {}]
  %s12 = inlined_call_operand.vmem [shape: f32[8,4], index: 12, kind: output, shape index: {}]
  %s13 = sld [smem:[#allocation0]]
  $region66: #{tpu_custom_call.1} parent=0
    _
  %s15 = ssub.s32 1, %s13
  %s16 = scalar_select 0, %s15, %s13
  $region1: #{tpu_custom_call.1} parent=0
    #allocation3 [shape = 'u8[28672]{0}', space=vmem, size = 0x7000, scoped, tag = 'input window, operand 6, single buffered']
    #allocation4 [shape = 's32[1]{0}', space=sflag, size = 0x4, scoped, tag = 'scoped memory for tpu_custom_call.1']
    #allocation5 [shape = 'u8[28672]{0}', space=vmem, size = 0x7000, scoped, tag = 'input window, operand 8, single buffered']
    #allocation6 [shape = 's32[1]{0}', space=sflag, size = 0x4, scoped, tag = 'scoped memory for tpu_custom_call.1']
    %17 = vsyncpa [#allocation4], 0
    %18 = vsyncpa [#allocation6], 0
    // Predicated region
    $region2: #{tpu_custom_call.1} parent=1 // pred_check
      _
    $region3: #{tpu_custom_call.1} parent=1 // pred_check_branch
      %20 = sbr.rel (0) target = $region5
    $region4: #{tpu_custom_call.1} parent=1 // pred_region
      _
    $region5: #{tpu_custom_call.1} parent=1 // pred_fallthru
      _
    // Predicated region
    $region6: #{tpu_custom_call.1} parent=1 // pred_check
      _
    $region7: #{tpu_custom_call.1} parent=1 // pred_check_branch
      %22 = sbr.rel (0) target = $region9
    $region8: #{tpu_custom_call.1} parent=1 // pred_region
      _
    $region9: #{tpu_custom_call.1} parent=1 // pred_fallthru
      _
    // Predicated region
    $region10: #{tpu_custom_call.1} parent=1 // pred_check
      _
    $region11: #{tpu_custom_call.1} parent=1 // pred_check_branch
      %24 = sbr.rel (0) target = $region13
    $region12: #{tpu_custom_call.1} parent=1 // pred_region
      _
    $region13: #{tpu_custom_call.1} parent=1 // pred_fallthru
      _
    // Predicated region
    $region14: #{tpu_custom_call.1} parent=1 // pred_check
      _
    $region15: #{tpu_custom_call.1} parent=1 // pred_check_branch
      %26 = sbr.rel (0) target = $region17
    $region16: #{tpu_custom_call.1} parent=1 // pred_region
      _
    $region17: #{tpu_custom_call.1} parent=1 // pred_fallthru
      _
    // Predicated region
    $region18: #{tpu_custom_call.1} parent=1 // pred_check
      _
    $region19: #{tpu_custom_call.1} parent=1 // pred_check_branch
      %28 = sbr.rel (0) target = $region21
    $region20: #{tpu_custom_call.1} parent=1 // pred_region
      _
    $region21: #{tpu_custom_call.1} parent=1 // pred_fallthru
      _
    // Predicated region
    $region22: #{tpu_custom_call.1} parent=1 // pred_check
      _
    $region23: #{tpu_custom_call.1} parent=1 // pred_check_branch
      %30 = sbr.rel (0) target = $region25
    $region24: #{tpu_custom_call.1} parent=1 // pred_region
      _
    $region25: #{tpu_custom_call.1} parent=1 // pred_fallthru
      _
    // Predicated region
    $region26: #{tpu_custom_call.1} parent=1 // pred_check
      _
    $region27: #{tpu_custom_call.1} parent=1 // pred_check_branch
      %32 = sbr.rel (0) target = $region29
    $region28: #{tpu_custom_call.1} parent=1 // pred_region
      %s34 = ssub.s32 896, 896
      %35 = vsyncadd [#allocation4], %s34
      %s36 = sshll.u32 [#allocation3], 4
      %s37 = int_to_ptr.vmem [resolvable:$true] %s36
      %42 = dma.hbm_to_vmem [thread:$0]  %s6, 896, %s37, [#allocation4], 128, 128, 8
    $region29: #{tpu_custom_call.1} parent=1 // pred_fallthru
      _
    // Predicated region
    $region30: #{tpu_custom_call.1} parent=1 // pred_check
      _
    $region31: #{tpu_custom_call.1} parent=1 // pred_check_branch
      %44 = sbr.rel (0) target = $region33
    $region32: #{tpu_custom_call.1} parent=1 // pred_region
      _
    $region33: #{tpu_custom_call.1} parent=1 // pred_fallthru
      _
    // Predicated region
    $region34: #{tpu_custom_call.1} parent=1 // pred_check
      _
    $region35: #{tpu_custom_call.1} parent=1 // pred_check_branch
      %46 = sbr.rel (0) target = $region37
    $region36: #{tpu_custom_call.1} parent=1 // pred_region
      %s48 = ssub.s32 896, 896
      %49 = vsyncadd [#allocation6], %s48
      %s50 = sshll.u32 [#allocation5], 4
      %s51 = int_to_ptr.vmem [resolvable:$true] %s50
      %56 = dma.hbm_to_vmem [thread:$0]  %s8, 896, %s51, [#allocation6], 128, 128, 8
    $region37: #{tpu_custom_call.1} parent=1 // pred_fallthru
      _
    // Predicated region
    $region38: #{tpu_custom_call.1} parent=1 // pred_check
      _
    $region39: #{tpu_custom_call.1} parent=1 // pred_check_branch
      %58 = sbr.rel (0) target = $region41
    $region40: #{tpu_custom_call.1} parent=1 // pred_region
      _
    $region41: #{tpu_custom_call.1} parent=1 // pred_fallthru
      _
    // Predicated region
    $region42: #{tpu_custom_call.1} parent=1 // pred_check
      _
    $region43: #{tpu_custom_call.1} parent=1 // pred_check_branch
      %60 = sbr.rel (0) target = $region45
    $region44: #{tpu_custom_call.1} parent=1 // pred_region
      _
    $region45: #{tpu_custom_call.1} parent=1 // pred_fallthru
      _
    // Predicated region
    $region46: #{tpu_custom_call.1} parent=1 // pred_check
      _
    $region47: #{tpu_custom_call.1} parent=1 // pred_check_branch
      %62 = sbr.rel (0) target = $region49
    $region48: #{tpu_custom_call.1} parent=1 // pred_region
      _
    $region49: #{tpu_custom_call.1} parent=1 // pred_fallthru
      _
    // Predicated region
    $region50: #{tpu_custom_call.1} parent=1 // pred_check
      _
    $region51: #{tpu_custom_call.1} parent=1 // pred_check_branch
      %64 = sbr.rel (0) target = $region53
    $region52: #{tpu_custom_call.1} parent=1 // pred_region
      %65 = dma.done [#allocation4], 896
    $region53: #{tpu_custom_call.1} parent=1 // pred_fallthru
      _
    // Predicated region
    $region54: #{tpu_custom_call.1} parent=1 // pred_check
      _
    $region55: #{tpu_custom_call.1} parent=1 // pred_check_branch
      %67 = sbr.rel (0) target = $region57
    $region56: #{tpu_custom_call.1} parent=1 // pred_region
      %68 = dma.done [#allocation6], 896
    $region57: #{tpu_custom_call.1} parent=1 // pred_fallthru
      _
    %v69 = vld [vmem:[%s2] sm:$0x3]
    %v70 = vld [vmem:[%s0] sm:$0xff]
    %72 = vset.pattern.permute.xlu0 0
    %73 = vperm.xlu0 %72, %v70
    %v74 = vpop.permute.xlu0 %73
    %v76 = vlaneseq
    %v77 = vshrl.u32 %v76, 7
    %v78 = vsub.s32 0, %v77
    %v79 = vrot.slane %v69, %v78
    %v80 = vmul.f32 %v74, %v79
    %v81 = vld [vmem:[%s1] sm:$0xff]
    %83 = vset.pattern.permute.xlu0 0
    %84 = vperm.xlu0 %83, %v81
    %v85 = vpop.permute.xlu0 %84
    %v87 = vlaneseq
    %v88 = vshrl.u32 %v87, 7
    %v89 = vsub.s32 1, %v88
    %v90 = vrot.slane %v69, %v89
    %v91 = vmul.f32 %v85, %v90
    %v92 = vadd.f32 %v80, %v91
    %v93 = vld [vmem:[%s3] sm:$0x1]
    %v95 = vlaneseq
    %v96 = vshrl.u32 %v95, 7
    %v97 = vsub.s32 0, %v96
    %v98 = vrot.slane %v93, %v97
    %v100 = vadd.f32 %v92, %v98
    %v101 = vtanh.pop %v100
    %vm102 = vcmask 408576
    %103 = vst.msk [vmem:[#allocation2] sm:$0xff] %vm102, %v101
    %v104 = vld [vmem:[#allocation2] sm:$0xff]
    %v105 = vld [vmem:[%s4] sm:$0xff]
    %v106 = vld [vmem:[%s4 + $0x8] sm:$0xff]
    %v107 = vld [vmem:[%s4 + $0x10] sm:$0xff]
    %v108 = vld [vmem:[%s4 + $0x18] sm:$0xff]
    %v109 = vld [vmem:[%s4 + $0x20] sm:$0xff]
    %v110 = vld [vmem:[%s4 + $0x28] sm:$0xff]
    %v111 = vld [vmem:[%s4 + $0x30] sm:$0x3]
    %v112 = vld [vmem:[%s5] sm:$0x1]
    %v114 = vlaneseq
    %v115 = vshrl.u32 %v114, 7
    %v116 = vsub.s32 0, %v115
    %v117 = vrot.slane %v112, %v116
    %v120 = vsel %vm102, %v104, 0
    %vm122 = vcmask 1041408
    %v124 = vsel %vm122, %v111, 0
    %126 = vmatprep.subr.mxu0 0.0
    %127 = vmatpush1.msra.mxu0 %v105
    %128 = vmatprep.subr.mxu0 0.0
    %129 = vmatpush1.msra.mxu0 %v106
    %130 = vmatprep.subr.mxu0 0.0
    %131 = vmatpush1.msra.mxu0 %v107
    %132 = vmatprep.subr.mxu0 0.0
    %133 = vmatpush1.msra.mxu0 %v108
    %134 = vmatprep.subr.mxu0 0.0
    %135 = vmatpush1.msra.mxu0 %v109
    %136 = vmatprep.subr.mxu0 0.0
    %137 = vmatpush1.msra.mxu0 %v110
    %138 = vmatprep.subr.mxu0 0.0
    %139 = vmatpush1.msra.mxu0 %v124
    %140 = vmatprep.subr.mxu0 0.0
    %141 = vmatpush1.msra.mxu0 0.0
    %142 = vmatprep.subr.mxu0 0.0
    %143 = vmatpush1.msra.mxu0 0.0
    %144 = vmatprep.subr.mxu0 0.0
    %145 = vmatpush1.msra.mxu0 0.0
    %146 = vmatprep.subr.mxu0 0.0
    %147 = vmatpush1.msra.mxu0 0.0
    %148 = vmatprep.subr.mxu0 0.0
    %149 = vmatpush1.msra.mxu0 0.0
    %150 = vmatprep.subr.mxu0 0.0
    %151 = vmatpush1.msra.mxu0 0.0
    %152 = vmatprep.subr.mxu0 0.0
    %153 = vmatpush1.msra.mxu0 0.0
    %154 = vmatprep.subr.mxu0 0.0
    %155 = vmatpush1.msra.mxu0 0.0
    %156 = vmatprep.subr.mxu0 0.0
    %157 = vmatpush1.msra.mxu0 0.0
    %158 = vmatprep.subr.mxu0 0.0
    %159 = vmatpush1.msra.mxu0 0.0
    %160 = vmatprep.subr.mxu0 0.0
    %161 = vmatpush1.msra.mxu0 0.0
    %162 = vmatprep.subr.mxu0 0.0
    %163 = vmatpush1.msra.mxu0 0.0
    %164 = vmatprep.subr.mxu0 0.0
    %165 = vmatpush1.msra.mxu0 0.0
    %166 = vmatprep.subr.mxu0 0.0
    %167 = vmatpush1.msra.mxu0 0.0
    %168 = vmatprep.subr.mxu0 0.0
    %169 = vmatpush1.msra.mxu0 0.0
    %170 = vmatprep.subr.mxu0 0.0
    %171 = vmatpush1.msra.mxu0 0.0
    %172 = vmatprep.subr.mxu0 0.0
    %173 = vmatpush1.msra.mxu0 0.0
    %174 = vmatprep.subr.mxu0 0.0
    %175 = vmatpush1.msra.mxu0 0.0
    %176 = vmatprep.subr.mxu0 0.0
    %177 = vmatpush1.msra.mxu0 0.0
    %178 = vmatprep.subr.mxu0 0.0
    %179 = vmatpush1.msra.mxu0 0.0
    %180 = vmatprep.subr.mxu0 0.0
    %181 = vmatpush1.msra.mxu0 0.0
    %182 = vmatprep.subr.mxu0 0.0
    %183 = vmatpush1.msra.mxu0 0.0
    %184 = vmatprep.subr.mxu0 0.0
    %185 = vmatpush1.msra.mxu0 0.0
    %186 = vmatprep.subr.mxu0 0.0
    %187 = vmatpush1.msra.mxu0 0.0
    %188 = vmatprep.subr.mxu0 0.0
    %189 = vmatpush1.msra.mxu0 0.0
    %190 = vmatprep.mubr.f32.mxu0 0.0
    %191 = vmatmul.mubr.f32.gmra.mrb[0].mxu0 %v120
    %v192 = vpop.f32.mrb[0].mxu0
    %v193 = vadd.f32 %v117, %v192
    %v194 = vpop.f32.mrb[0].mxu0
    %195 = vdwg.mxu0
    %v196 = vtanh.pop %v193
    %197 = vst.msk [vmem:[#allocation2] sm:$0xff] %vm102, %v196
    %v198 = vld [vmem:[#allocation2] sm:$0xff]
    %v199 = vld [vmem:[#allocation3] sm:$0xff]
    %v200 = vld [vmem:[#allocation3 + $0x8] sm:$0xff]
    %v201 = vld [vmem:[#allocation3 + $0x10] sm:$0xff]
    %v202 = vld [vmem:[#allocation3 + $0x18] sm:$0xff]
    %v203 = vld [vmem:[#allocation3 + $0x20] sm:$0xff]
    %v204 = vld [vmem:[#allocation3 + $0x28] sm:$0xff]
    %v205 = vld [vmem:[#allocation3 + $0x30] sm:$0x3]
    %v206 = vld [vmem:[%s7] sm:$0x1]
    %v208 = vlaneseq
    %v209 = vshrl.u32 %v208, 7
    %v210 = vsub.s32 0, %v209
    %v211 = vrot.slane %v206, %v210
    %v214 = vsel %vm102, %v198, 0
    %v217 = vsel %vm122, %v205, 0
    %219 = vmatprep.subr.mxu0 0.0
    %220 = vmatpush1.msra.mxu0 %v199
    %221 = vmatprep.subr.mxu0 0.0
    %222 = vmatpush1.msra.mxu0 %v200
    %223 = vmatprep.subr.mxu0 0.0
    %224 = vmatpush1.msra.mxu0 %v201
    %225 = vmatprep.subr.mxu0 0.0
    %226 = vmatpush1.msra.mxu0 %v202
    %227 = vmatprep.subr.mxu0 0.0
    %228 = vmatpush1.msra.mxu0 %v203
    %229 = vmatprep.subr.mxu0 0.0
    %230 = vmatpush1.msra.mxu0 %v204
    %231 = vmatprep.subr.mxu0 0.0
    %232 = vmatpush1.msra.mxu0 %v217
    %233 = vmatprep.subr.mxu0 0.0
    %234 = vmatpush1.msra.mxu0 0.0
    %235 = vmatprep.subr.mxu0 0.0
    %236 = vmatpush1.msra.mxu0 0.0
    %237 = vmatprep.subr.mxu0 0.0
    %238 = vmatpush1.msra.mxu0 0.0
    %239 = vmatprep.subr.mxu0 0.0
    %240 = vmatpush1.msra.mxu0 0.0
    %241 = vmatprep.subr.mxu0 0.0
    %242 = vmatpush1.msra.mxu0 0.0
    %243 = vmatprep.subr.mxu0 0.0
    %244 = vmatpush1.msra.mxu0 0.0
    %245 = vmatprep.subr.mxu0 0.0
    %246 = vmatpush1.msra.mxu0 0.0
    %247 = vmatprep.subr.mxu0 0.0
    %248 = vmatpush1.msra.mxu0 0.0
    %249 = vmatprep.subr.mxu0 0.0
    %250 = vmatpush1.msra.mxu0 0.0
    %251 = vmatprep.subr.mxu0 0.0
    %252 = vmatpush1.msra.mxu0 0.0
    %253 = vmatprep.subr.mxu0 0.0
    %254 = vmatpush1.msra.mxu0 0.0
    %255 = vmatprep.subr.mxu0 0.0
    %256 = vmatpush1.msra.mxu0 0.0
    %257 = vmatprep.subr.mxu0 0.0
    %258 = vmatpush1.msra.mxu0 0.0
    %259 = vmatprep.subr.mxu0 0.0
    %260 = vmatpush1.msra.mxu0 0.0
    %261 = vmatprep.subr.mxu0 0.0
    %262 = vmatpush1.msra.mxu0 0.0
    %263 = vmatprep.subr.mxu0 0.0
    %264 = vmatpush1.msra.mxu0 0.0
    %265 = vmatprep.subr.mxu0 0.0
    %266 = vmatpush1.msra.mxu0 0.0
    %267 = vmatprep.subr.mxu0 0.0
    %268 = vmatpush1.msra.mxu0 0.0
    %269 = vmatprep.subr.mxu0 0.0
    %270 = vmatpush1.msra.mxu0 0.0
    %271 = vmatprep.subr.mxu0 0.0
    %272 = vmatpush1.msra.mxu0 0.0
    %273 = vmatprep.subr.mxu0 0.0
    %274 = vmatpush1.msra.mxu0 0.0
    %275 = vmatprep.subr.mxu0 0.0
    %276 = vmatpush1.msra.mxu0 0.0
    %277 = vmatprep.subr.mxu0 0.0
    %278 = vmatpush1.msra.mxu0 0.0
    %279 = vmatprep.subr.mxu0 0.0
    %280 = vmatpush1.msra.mxu0 0.0
    %281 = vmatprep.subr.mxu0 0.0
    %282 = vmatpush1.msra.mxu0 0.0
    %283 = vmatprep.mubr.f32.mxu0 0.0
    %284 = vmatmul.mubr.f32.gmra.mrb[0].mxu0 %v214
    %v285 = vpop.f32.mrb[0].mxu0
    %v286 = vadd.f32 %v211, %v285
    %v287 = vpop.f32.mrb[0].mxu0
    %288 = vdwg.mxu0
    %v289 = vtanh.pop %v286
    %290 = vst.msk [vmem:[#allocation2] sm:$0xff] %vm102, %v289
    %v291 = vld [vmem:[#allocation2] sm:$0xff]
    %v292 = vld [vmem:[#allocation5] sm:$0xff]
    %v293 = vld [vmem:[#allocation5 + $0x8] sm:$0xff]
    %v294 = vld [vmem:[#allocation5 + $0x10] sm:$0xff]
    %v295 = vld [vmem:[#allocation5 + $0x18] sm:$0xff]
    %v296 = vld [vmem:[#allocation5 + $0x20] sm:$0xff]
    %v297 = vld [vmem:[#allocation5 + $0x28] sm:$0xff]
    %v298 = vld [vmem:[#allocation5 + $0x30] sm:$0x3]
    %v299 = vld [vmem:[%s9] sm:$0x1]
    %v301 = vlaneseq
    %v302 = vshrl.u32 %v301, 7
    %v303 = vsub.s32 0, %v302
    %v304 = vrot.slane %v299, %v303
    %v307 = vsel %vm102, %v291, 0
    %v310 = vsel %vm122, %v298, 0
    %312 = vmatprep.subr.mxu0 0.0
    %313 = vmatpush1.msra.mxu0 %v292
    %314 = vmatprep.subr.mxu0 0.0
    %315 = vmatpush1.msra.mxu0 %v293
    %316 = vmatprep.subr.mxu0 0.0
    %317 = vmatpush1.msra.mxu0 %v294
    %318 = vmatprep.subr.mxu0 0.0
    %319 = vmatpush1.msra.mxu0 %v295
    %320 = vmatprep.subr.mxu0 0.0
    %321 = vmatpush1.msra.mxu0 %v296
    %322 = vmatprep.subr.mxu0 0.0
    %323 = vmatpush1.msra.mxu0 %v297
    %324 = vmatprep.subr.mxu0 0.0
    %325 = vmatpush1.msra.mxu0 %v310
    %326 = vmatprep.subr.mxu0 0.0
    %327 = vmatpush1.msra.mxu0 0.0
    %328 = vmatprep.subr.mxu0 0.0
    %329 = vmatpush1.msra.mxu0 0.0
    %330 = vmatprep.subr.mxu0 0.0
    %331 = vmatpush1.msra.mxu0 0.0
    %332 = vmatprep.subr.mxu0 0.0
    %333 = vmatpush1.msra.mxu0 0.0
    %334 = vmatprep.subr.mxu0 0.0
    %335 = vmatpush1.msra.mxu0 0.0
    %336 = vmatprep.subr.mxu0 0.0
    %337 = vmatpush1.msra.mxu0 0.0
    %338 = vmatprep.subr.mxu0 0.0
    %339 = vmatpush1.msra.mxu0 0.0
    %340 = vmatprep.subr.mxu0 0.0
    %341 = vmatpush1.msra.mxu0 0.0
    %342 = vmatprep.subr.mxu0 0.0
    %343 = vmatpush1.msra.mxu0 0.0
    %344 = vmatprep.subr.mxu0 0.0
    %345 = vmatpush1.msra.mxu0 0.0
    %346 = vmatprep.subr.mxu0 0.0
    %347 = vmatpush1.msra.mxu0 0.0
    %348 = vmatprep.subr.mxu0 0.0
    %349 = vmatpush1.msra.mxu0 0.0
    %350 = vmatprep.subr.mxu0 0.0
    %351 = vmatpush1.msra.mxu0 0.0
    %352 = vmatprep.subr.mxu0 0.0
    %353 = vmatpush1.msra.mxu0 0.0
    %354 = vmatprep.subr.mxu0 0.0
    %355 = vmatpush1.msra.mxu0 0.0
    %356 = vmatprep.subr.mxu0 0.0
    %357 = vmatpush1.msra.mxu0 0.0
    %358 = vmatprep.subr.mxu0 0.0
    %359 = vmatpush1.msra.mxu0 0.0
    %360 = vmatprep.subr.mxu0 0.0
    %361 = vmatpush1.msra.mxu0 0.0
    %362 = vmatprep.subr.mxu0 0.0
    %363 = vmatpush1.msra.mxu0 0.0
    %364 = vmatprep.subr.mxu0 0.0
    %365 = vmatpush1.msra.mxu0 0.0
    %366 = vmatprep.subr.mxu0 0.0
    %367 = vmatpush1.msra.mxu0 0.0
    %368 = vmatprep.subr.mxu0 0.0
    %369 = vmatpush1.msra.mxu0 0.0
    %370 = vmatprep.subr.mxu0 0.0
    %371 = vmatpush1.msra.mxu0 0.0
    %372 = vmatprep.subr.mxu0 0.0
    %373 = vmatpush1.msra.mxu0 0.0
    %374 = vmatprep.subr.mxu0 0.0
    %375 = vmatpush1.msra.mxu0 0.0
    %376 = vmatprep.mubr.f32.mxu0 0.0
    %377 = vmatmul.mubr.f32.gmra.mrb[0].mxu0 %v307
    %v378 = vpop.f32.mrb[0].mxu0
    %v379 = vadd.f32 %v304, %v378
    %v380 = vpop.f32.mrb[0].mxu0
    %381 = vdwg.mxu0
    %v382 = vtanh.pop %v379
    %383 = vst.msk [vmem:[#allocation2] sm:$0xff] %vm102, %v382
    %v384 = vld [vmem:[#allocation2] sm:$0xff]
    %v385 = vld [vmem:[%s10] sm:$0xff]
    %v386 = vld [vmem:[%s10 + $0x8] sm:$0xff]
    %v387 = vld [vmem:[%s10 + $0x10] sm:$0xff]
    %v388 = vld [vmem:[%s10 + $0x18] sm:$0xff]
    %v389 = vld [vmem:[%s10 + $0x20] sm:$0xff]
    %v390 = vld [vmem:[%s10 + $0x28] sm:$0xff]
    %v391 = vld [vmem:[%s10 + $0x30] sm:$0x3]
    %v392 = vld [vmem:[%s11] sm:$0x1]
    %v394 = vlaneseq
    %v395 = vshrl.u32 %v394, 7
    %v396 = vsub.s32 0, %v395
    %v397 = vrot.slane %v392, %v396
    %v400 = vsel %vm102, %v384, 0
    %v403 = vsel %vm122, %v391, 0
    %405 = vmatprep.subr.mxu0 0.0
    %406 = vmatpush1.msra.mxu0 %v385
    %407 = vmatprep.subr.mxu0 0.0
    %408 = vmatpush1.msra.mxu0 %v386
    %409 = vmatprep.subr.mxu0 0.0
    %410 = vmatpush1.msra.mxu0 %v387
    %411 = vmatprep.subr.mxu0 0.0
    %412 = vmatpush1.msra.mxu0 %v388
    %413 = vmatprep.subr.mxu0 0.0
    %414 = vmatpush1.msra.mxu0 %v389
    %415 = vmatprep.subr.mxu0 0.0
    %416 = vmatpush1.msra.mxu0 %v390
    %417 = vmatprep.subr.mxu0 0.0
    %418 = vmatpush1.msra.mxu0 %v403
    %419 = vmatprep.subr.mxu0 0.0
    %420 = vmatpush1.msra.mxu0 0.0
    %421 = vmatprep.subr.mxu0 0.0
    %422 = vmatpush1.msra.mxu0 0.0
    %423 = vmatprep.subr.mxu0 0.0
    %424 = vmatpush1.msra.mxu0 0.0
    %425 = vmatprep.subr.mxu0 0.0
    %426 = vmatpush1.msra.mxu0 0.0
    %427 = vmatprep.subr.mxu0 0.0
    %428 = vmatpush1.msra.mxu0 0.0
    %429 = vmatprep.subr.mxu0 0.0
    %430 = vmatpush1.msra.mxu0 0.0
    %431 = vmatprep.subr.mxu0 0.0
    %432 = vmatpush1.msra.mxu0 0.0
    %433 = vmatprep.subr.mxu0 0.0
    %434 = vmatpush1.msra.mxu0 0.0
    %435 = vmatprep.subr.mxu0 0.0
    %436 = vmatpush1.msra.mxu0 0.0
    %437 = vmatprep.subr.mxu0 0.0
    %438 = vmatpush1.msra.mxu0 0.0
    %439 = vmatprep.subr.mxu0 0.0
    %440 = vmatpush1.msra.mxu0 0.0
    %441 = vmatprep.subr.mxu0 0.0
    %442 = vmatpush1.msra.mxu0 0.0
    %443 = vmatprep.subr.mxu0 0.0
    %444 = vmatpush1.msra.mxu0 0.0
    %445 = vmatprep.subr.mxu0 0.0
    %446 = vmatpush1.msra.mxu0 0.0
    %447 = vmatprep.subr.mxu0 0.0
    %448 = vmatpush1.msra.mxu0 0.0
    %449 = vmatprep.subr.mxu0 0.0
    %450 = vmatpush1.msra.mxu0 0.0
    %451 = vmatprep.subr.mxu0 0.0
    %452 = vmatpush1.msra.mxu0 0.0
    %453 = vmatprep.subr.mxu0 0.0
    %454 = vmatpush1.msra.mxu0 0.0
    %455 = vmatprep.subr.mxu0 0.0
    %456 = vmatpush1.msra.mxu0 0.0
    %457 = vmatprep.subr.mxu0 0.0
    %458 = vmatpush1.msra.mxu0 0.0
    %459 = vmatprep.subr.mxu0 0.0
    %460 = vmatpush1.msra.mxu0 0.0
    %461 = vmatprep.subr.mxu0 0.0
    %462 = vmatpush1.msra.mxu0 0.0
    %463 = vmatprep.subr.mxu0 0.0
    %464 = vmatpush1.msra.mxu0 0.0
    %465 = vmatprep.subr.mxu0 0.0
    %466 = vmatpush1.msra.mxu0 0.0
    %467 = vmatprep.subr.mxu0 0.0
    %468 = vmatpush1.msra.mxu0 0.0
    %469 = vmatprep.mubr.f32.mxu0 0.0
    %470 = vmatmul.mubr.f32.gmra.mrb[0].mxu0 %v400
    %v471 = vpop.f32.mrb[0].mxu0
    %v472 = vadd.f32 %v397, %v471
    %v473 = vpop.f32.mrb[0].mxu0
    %474 = vdwg.mxu0
    %v475 = vlaneseq
    %v476 = vand.u32 %v475, 127
    %vm477 = vcmp.lt.s32.totalorder %v476, 2
    %v478 = vmul.f32 %v472, 1.442695
    %v479 = vpow.pop %v478
    %v480 = vsel %vm477, %v479, %v472
    %vm481 = vcmask 31744
    %482 = vst.msk [vmem:[%s12] sm:$0xff] %vm481, %v480
    // Predicated region
    $region58: #{tpu_custom_call.1} parent=1 // pred_check
      _
    $region59: #{tpu_custom_call.1} parent=1 // pred_check_branch
      %484 = sbr.rel (0) target = $region61
    $region60: #{tpu_custom_call.1} parent=1 // pred_region
      _
    $region61: #{tpu_custom_call.1} parent=1 // pred_fallthru
      _
    // Predicated region
    $region62: #{tpu_custom_call.1} parent=1 // pred_check
      _
    $region63: #{tpu_custom_call.1} parent=1 // pred_check_branch
      %486 = sbr.rel (0) target = $region65
    $region64: #{tpu_custom_call.1} parent=1 // pred_region
      _
    $region65: #{tpu_custom_call.1} parent=1 // pred_fallthru
      _
    %487 = vsyncpa [#allocation4], 1
    %488 = vsyncpa [#allocation6], 1

</llo_original>
